<compile_context>
chip_gen: v7x
topology: tpu7x:2x2x1
jax: 0.10.0
libtpu: 0.0.40
codegen_flags: <defaults>
</compile_context>

<pallas_src>
import jax
import jax.numpy as jnp
from jax.experimental import pallas as pl
from jax.experimental.pallas import tpu as pltpu


def _im2col_matmul_kernel(p_ref, w_ref, b_ref, o_ref):
    """One M-tile of the conv-as-matmul.

    p_ref: (TM, K)         im2col patch tile          (K = KH*KW*Cin)
    w_ref: (K, Cout_pad)   dense weight slab          (Cout zero-padded to 128n)
    b_ref: (1, Cout_pad)   bias (zero-padded)
    o_ref: (TM, Cout_pad)  lane-dense output tile
    """
    acc = jnp.dot(p_ref[...], w_ref[...], preferred_element_type=jnp.float32)
    o_ref[...] = (acc + b_ref[...].astype(jnp.float32)).astype(o_ref.dtype)


def spectral_norm_conv2d_forward(x_nchw, weight, bias, u,
                                 stride=1, padding=0, power_iterations=1):
    """Forward pass of SpectralNormConv2d.

    x_nchw : (N, Cin, H, W)    weight : (Cout, Cin, KH, KW)
    bias   : (Cout,)           u      : (Cout, 1)  power-iteration state
    Returns (out_nchw, new_u).
    """
    Cout, Cin, KH, KW = weight.shape
    N, _, H, W = x_nchw.shape

    # ---- power iteration (plain-JAX glue; per the reference implementation
    # the resulting sigma is never applied to the conv weight) ----
    wm = weight.reshape(Cout, -1)

    def _l2n(v):
        return v / (jnp.linalg.norm(v) + 1e-12)

    u_new = u
    v = None
    for _ in range(power_iterations):
        v = _l2n(wm.T @ u_new)
        u_new = _l2n(wm @ v)
    sigma = jnp.dot(u_new.reshape(-1), (wm @ v).reshape(-1))
    del sigma  # computed but (faithfully) not applied to the weight

    H_out = (H + 2 * padding - KH) // stride + 1
    W_out = (W + 2 * padding - KW) // stride + 1
    K = KH * KW * Cin
    M = N * H_out * W_out

    # ---- wrapper-side im2col: (M, K) patch matrix, columns ordered
    # (kh-major, kw, cin) ----
    x_nhwc = jnp.transpose(x_nchw, (0, 2, 3, 1))
    x_pad = jnp.pad(x_nhwc, ((0, 0), (padding, padding),
                             (padding, padding), (0, 0)))
    cols = []
    for kh in range(KH):
        for kw in range(KW):
            cols.append(x_pad[:, kh:kh + (H_out - 1) * stride + 1:stride,
                              kw:kw + (W_out - 1) * stride + 1:stride, :])
    patches = jnp.concatenate(cols, axis=-1)          # (N, H_out, W_out, K)
    patches = patches.reshape(M, K)

    # ---- dense weight slab (K, Cout_pad), column order matching patches;
    # Cout zero-padded to a multiple of 128 for lane-dense output ----
    Cout_pad = ((Cout + 127) // 128) * 128
    w_slab = jnp.transpose(weight, (2, 3, 1, 0)).reshape(K, Cout)
    w_slab = jnp.pad(w_slab, ((0, 0), (0, Cout_pad - Cout)))
    b_slab = jnp.pad(bias, (0, Cout_pad - Cout)).reshape(1, Cout_pad)

    # ---- batch folded into M; tile M so >1 grid step only when both
    # TensorCores can get work ----
    TM = 256
    if M < 2 * TM:
        TM = max(8, ((M + 7) // 8) * 8)
    M_pad = pl.cdiv(M, TM) * TM
    if M_pad != M:
        patches = jnp.pad(patches, ((0, M_pad - M), (0, 0)))

    out_2d = pl.pallas_call(
        _im2col_matmul_kernel,
        out_shape=jax.ShapeDtypeStruct((M_pad, Cout_pad), x_nchw.dtype),
        grid_spec=pltpu.PrefetchScalarGridSpec(
            num_scalar_prefetch=0,
            grid=(M_pad // TM,),
            in_specs=[
                pl.BlockSpec((TM, K), lambda i: (i, 0)),
                pl.BlockSpec((K, Cout_pad), lambda i: (0, 0)),
                pl.BlockSpec((1, Cout_pad), lambda i: (0, 0)),
            ],
            out_specs=pl.BlockSpec((TM, Cout_pad), lambda i: (i, 0)),
        ),
        compiler_params=pltpu.CompilerParams(
            dimension_semantics=("parallel",)),
    )(patches, w_slab, b_slab)

    # Drop M padding and channel padding, restore NCHW (PyTorch convention).
    out_nhwc = out_2d[:M, :Cout].reshape(N, H_out, W_out, Cout)
    out_nchw = jnp.transpose(out_nhwc, (0, 3, 1, 2))
    return out_nchw, u_new


if __name__ == "__main__":
    # Module config: SpectralNormConv2d(in_channels=4, out_channels=8,
    #                                   kernel_size=3, stride=1, padding=1)
    in_channels, out_channels, kernel_size = 4, 8, 3
    stride, padding = 1, 1
    N, H, W = 2, 16, 16

    key = jax.random.PRNGKey(0)
    kx, kw, kb, ku = jax.random.split(key, 4)

    x = jax.random.normal(kx, (N, in_channels, H, W), dtype=jnp.float32)

    # Deterministic Conv2d-style init (kaiming-uniform-ish bounds).
    fan_in = in_channels * kernel_size * kernel_size
    bound = 1.0 / jnp.sqrt(jnp.float32(fan_in))
    weight = jax.random.uniform(
        kw, (out_channels, in_channels, kernel_size, kernel_size),
        dtype=jnp.float32, minval=-bound, maxval=bound)
    bias = jax.random.uniform(kb, (out_channels,), dtype=jnp.float32,
                              minval=-bound, maxval=bound)
    # power-iteration vector u (as in the PyTorch wrapper: randn(out_ch, 1))
    u0 = jax.random.normal(ku, (out_channels, 1), dtype=jnp.float32)

    out, u_new = spectral_norm_conv2d_forward(
        x, weight, bias, u0, stride=stride, padding=padding,
        power_iterations=1)
    out = jax.block_until_ready(out)

    # Cross-check against XLA's conv (same semantics as nn.Conv2d forward).
    ref = jax.lax.conv_general_dilated(
        x, weight, window_strides=(stride, stride),
        padding=((padding, padding), (padding, padding)),
        dimension_numbers=("NCHW", "OIHW", "NCHW"))
    ref = ref + bias.reshape(1, -1, 1, 1)

    assert out.shape == (N, out_channels, H, W), out.shape
    assert jnp.allclose(out, ref, atol=1e-3, rtol=1e-3), \
        float(jnp.max(jnp.abs(out - ref)))

    print("KERNEL_OK")
</pallas_src>

<mosaic_0001>
module attributes {stable_mosaic.version = 11 : i64} {
  func.func @_im2col_matmul_kernel(%arg0: i32, %arg1: memref<256x36xf32, #tpu.memory_space<vmem>>, %arg2: memref<36x128xf32, #tpu.memory_space<vmem>>, %arg3: memref<1x128xf32, #tpu.memory_space<vmem>>, %arg4: memref<256x128xf32, #tpu.memory_space<vmem>>) attributes {dimension_semantics = [#tpu.dimension_semantics<parallel>], iteration_bounds = array<i64: 2>, scalar_prefetch = 0 : i64, scratch_operands = 0 : i64, tpu.core_type = #tpu.core_type<tc>, window_params = [{transform_indices = @transform_0, window_bounds = array<i64: 256, 36>}, {pipeline_mode = #tpu.pipeline_mode<synchronous>, transform_indices = @transform_1, window_bounds = array<i64: 36, 128>}, {pipeline_mode = #tpu.pipeline_mode<synchronous>, transform_indices = @transform_2, window_bounds = array<i64: 1, 128>}, {transform_indices = @transform_3, window_bounds = array<i64: 256, 128>}]} {
    %c0 = arith.constant 0 : index
    %c0_0 = arith.constant 0 : index
    %0 = vector.load %arg1[%c0, %c0_0] : memref<256x36xf32, #tpu.memory_space<vmem>>, vector<256x36xf32>
    %c0_1 = arith.constant 0 : index
    %c0_2 = arith.constant 0 : index
    %1 = vector.load %arg2[%c0_1, %c0_2] : memref<36x128xf32, #tpu.memory_space<vmem>>, vector<36x128xf32>
    %cst = arith.constant dense<0.000000e+00> : vector<256x128xf32>
    %2 = tpu.matmul %0, %1, %cst {dimension_numbers = #tpu.dot_dimension_numbers<[1], [0], [0], [1], [0, 0, 1, 1], [], []>} : vector<256x36xf32>, vector<36x128xf32>, vector<256x128xf32> -> vector<256x128xf32>
    %c0_3 = arith.constant 0 : index
    %c0_4 = arith.constant 0 : index
    %3 = vector.load %arg3[%c0_3, %c0_4] : memref<1x128xf32, #tpu.memory_space<vmem>>, vector<1x128xf32>
    %4 = vector.broadcast %3 : vector<1x128xf32> to vector<256x128xf32>
    %5 = arith.addf %2, %4 : vector<256x128xf32>
    %c0_5 = arith.constant 0 : index
    %c0_6 = arith.constant 0 : index
    %6 = vector.load %arg4[%c0_5, %c0_6] : memref<256x128xf32, #tpu.memory_space<vmem>>, vector<256x128xf32>
    tpu.vector_store %arg4[%c0_5, %c0_6], %5 {strides = array<i32>} : memref<256x128xf32, #tpu.memory_space<vmem>>, vector<256x128xf32>,
    return
  }
  func.func @transform_0(%arg0: i32) -> (i32, i32) {
    %c0_i32 = arith.constant 0 : i32
    %c0_i32_0 = arith.constant 0 : i32
    return %arg0, %c0_i32 : i32, i32
  }
  func.func @transform_1(%arg0: i32) -> (i32, i32) {
    %c0_i32 = arith.constant 0 : i32
    %c0_i32_0 = arith.constant 0 : i32
    %c0_i32_1 = arith.constant 0 : i32
    return %c0_i32, %c0_i32_0 : i32, i32
  }
  func.func @transform_2(%arg0: i32) -> (i32, i32) {
    %c0_i32 = arith.constant 0 : i32
    %c0_i32_0 = arith.constant 0 : i32
    %c0_i32_1 = arith.constant 0 : i32
    return %c0_i32, %c0_i32_0 : i32, i32
  }
  func.func @transform_3(%arg0: i32) -> (i32, i32) {
    %c0_i32 = arith.constant 0 : i32
    %c0_i32_0 = arith.constant 0 : i32
    return %arg0, %c0_i32 : i32, i32
  }
}

</mosaic_0001>

<llo_original>
// kernel: tpu_custom_call.1
$region0: #{tpu_custom_call.1}
  #allocation0 [shape = 'u32[]', space=smem, size = 0x4, offset = 0x4, fixed_abs, tag = 'smem constant byte address 0x4 - core index']
  #allocation1 [shape = 'u32[144,128]{1,0:T(1,128)}', space=vmem, size = 0x12000, scoped, tag = 'internal scratch']
  %s0 = inlined_call_operand.vmem [shape: f32[512,36], index: 0, kind: input, shape index: {}]
  %s1 = inlined_call_operand.vmem [shape: f32[36,128], index: 1, kind: input, shape index: {}]
  %s2 = inlined_call_operand.vmem [shape: f32[1,128], index: 2, kind: input, shape index: {}]
  %s3 = inlined_call_operand.hbm [shape: f32[512,128], index: 3, kind: output, shape index: {}]
  %s4 = sld [smem:[#allocation0]]
  $region45: #{tpu_custom_call.1} parent=0
    _
  %s6 = ssub.s32 1, %s4
  %s7 = scalar_select 0, %s6, %s4
  $region1: #{tpu_custom_call.1} parent=0
    #allocation2 [shape = 'u8[262144]{0}', space=vmem, size = 0x40000, scoped, tag = 'output window, operand 0']
    #allocation3 [shape = 's32[2]{0}', space=sflag, size = 0x8, scoped, tag = 'scoped memory for tpu_custom_call.1']
    %8 = vsyncpa [#allocation3], 0
    %s9 = scalar_lea.sflag [#allocation3], 1
    %10 = vsyncpa %s9, 0
    loop: start=0, step=1, limit=4
    $region2: #{tpu_custom_call.1} parent=1 // loop_pre_header
      _
    $region3: #{tpu_custom_call.1} parent=1 // loop_header
      %s12 = sphi 0, %s16
      %p13 = scmp.ge.s32.totalorder %s12, 4
      %s22 = sphi 0, %s24
      %s25 = sphi 0, %s22
      %s26 = sphi 0, %s25
      %s42 = sphi 0, %s26
      %s46 = sphi 0, %s46
      %s48 = sphi 0, %s46
      %s49 = sphi 0, %s48
      %s63 = sphi 0, %s49
      %s67 = sphi 0, %s67
      %s69 = sphi 0, %s67
      %s70 = sphi 0, %s69
      %s84 = sphi 0, %s70
      %s90 = sphi 0, %s92
      %s93 = sphi 0, %s90
      %s94 = sphi 0, %s93
      %s110 = sphi 0, %s94
    $region4: #{tpu_custom_call.1} parent=1 // loop_header_branch
      %15 = sbr.rel (%p13) target = $region8
    $region5: #{tpu_custom_call.1} parent=1 // loop_body
      %s17 = ssub.s32 %s12, 1
      %s18 = ssub.s32 %s12, 2
      %s19 = sadd.s32 %s12, 1
      %s20 = ssub.s32 %s12, %s19
      %p21 = scmp.eq.s32.totalorder %s20, 0
      %s23 = sadd.s32 %s22, 1
      %s24 = scalar_select %p21, %s22, %s23
      %p27 = pneg %p21
      %p28 = scmp.eq.s32.totalorder %s12, 1
      %p29 = por %p27, %p28
      %p30 = scmp.ne.s32.totalorder %s22, %s25
      %p31 = scmp.eq.s32.totalorder %s12, 0
      %p32 = por %p30, %p31
      %p33 = scmp.ne.s32.totalorder %s22, %s25
      %p34 = scmp.eq.s32.totalorder %s17, 1
      %p35 = por %p33, %p34
      %p36 = scmp.ne.s32.totalorder %s25, %s26
      %p37 = scmp.eq.s32.totalorder %s17, 0
      %p38 = por %p36, %p37
      %p39 = scmp.ne.s32.totalorder %s25, %s26
      %p40 = scmp.eq.s32.totalorder %s18, 1
      %p41 = por %p39, %p40
      %p43 = scmp.ne.s32.totalorder %s26, %s42
      %p44 = scmp.eq.s32.totalorder %s18, 0
      %p45 = por %p43, %p44
      %s47 = sadd.s32 %s46, 1
      %p50 = scmp.eq.s32.totalorder %s12, 1
      %p51 = scmp.ne.s32.totalorder %s46, %s48
      %p52 = scmp.eq.s32.totalorder %s12, 0
      %p53 = por %p51, %p52
      %p54 = scmp.ne.s32.totalorder %s46, %s48
      %p55 = scmp.eq.s32.totalorder %s17, 1
      %p56 = por %p54, %p55
      %p57 = scmp.ne.s32.totalorder %s48, %s49
      %p58 = scmp.eq.s32.totalorder %s17, 0
      %p59 = por %p57, %p58
      %p60 = scmp.ne.s32.totalorder %s48, %s49
      %p61 = scmp.eq.s32.totalorder %s18, 1
      %p62 = por %p60, %p61
      %p64 = scmp.ne.s32.totalorder %s49, %s63
      %p65 = scmp.eq.s32.totalorder %s18, 0
      %p66 = por %p64, %p65
      %s68 = sadd.s32 %s67, 1
      %p71 = scmp.eq.s32.totalorder %s12, 1
      %p72 = scmp.ne.s32.totalorder %s67, %s69
      %p73 = scmp.eq.s32.totalorder %s12, 0
      %p74 = por %p72, %p73
      %p75 = scmp.ne.s32.totalorder %s67, %s69
      %p76 = scmp.eq.s32.totalorder %s17, 1
      %p77 = por %p75, %p76
      %p78 = scmp.ne.s32.totalorder %s69, %s70
      %p79 = scmp.eq.s32.totalorder %s17, 0
      %p80 = por %p78, %p79
      %p81 = scmp.ne.s32.totalorder %s69, %s70
      %p82 = scmp.eq.s32.totalorder %s18, 1
      %p83 = por %p81, %p82
      %p85 = scmp.ne.s32.totalorder %s70, %s84
      %p86 = scmp.eq.s32.totalorder %s18, 0
      %p87 = por %p85, %p86
      %s88 = ssub.s32 %s12, %s19
      %p89 = scmp.eq.s32.totalorder %s88, 0
      %s91 = sadd.s32 %s90, 1
      %s92 = scalar_select %p89, %s90, %s91
      %p95 = pneg %p89
      %p96 = scmp.eq.s32.totalorder %s12, 1
      %p97 = por %p95, %p96
      %p98 = scmp.ne.s32.totalorder %s90, %s93
      %p99 = scmp.eq.s32.totalorder %s12, 0
      %p100 = por %p98, %p99
      %p101 = scmp.ne.s32.totalorder %s90, %s93
      %p102 = scmp.eq.s32.totalorder %s17, 1
      %p103 = por %p101, %p102
      %p104 = scmp.ne.s32.totalorder %s93, %s94
      %p105 = scmp.eq.s32.totalorder %s17, 0
      %p106 = por %p104, %p105
      %p107 = scmp.ne.s32.totalorder %s93, %s94
      %p108 = scmp.eq.s32.totalorder %s18, 1
      %p109 = por %p107, %p108
      %p111 = scmp.ne.s32.totalorder %s94, %s110
      %p112 = scmp.eq.s32.totalorder %s18, 0
      %p113 = por %p111, %p112
      %p114 = scmp.le.s32.totalorder 1, %s12
      %p115 = scmp.lt.s32.totalorder %s12, 3
      %p116 = pnand %p114, %p115
      %p117 = pneg %p116
      // Predicated region
      $region9: #{tpu_custom_call.1} parent=5 // pred_check
        _
      $region10: #{tpu_custom_call.1} parent=5 // pred_check_branch
        %119 = sbr.rel (%p116) target = $region12
      $region11: #{tpu_custom_call.1} parent=5 // pred_region
        %s120 = ssub.s32 %s12, 1
        // Predicated region
        $region13: #{tpu_custom_call.1} parent=11 // pred_check
          %p121 = pneg %p59
        $region14: #{tpu_custom_call.1} parent=11 // pred_check_branch
          %123 = sbr.rel (%p121) target = $region16
        $region15: #{tpu_custom_call.1} parent=11 // pred_region
          _
        $region16: #{tpu_custom_call.1} parent=11 // pred_fallthru
          _
        // Predicated region
        $region17: #{tpu_custom_call.1} parent=11 // pred_check
          %p124 = pneg %p80
        $region18: #{tpu_custom_call.1} parent=11 // pred_check_branch
          %126 = sbr.rel (%p124) target = $region20
        $region19: #{tpu_custom_call.1} parent=11 // pred_region
          _
        $region20: #{tpu_custom_call.1} parent=11 // pred_fallthru
          _
      $region12: #{tpu_custom_call.1} parent=5 // pred_fallthru
        _
      %p127 = scmp.lt.s32.totalorder %s12, 2
      // Predicated region
      $region21: #{tpu_custom_call.1} parent=5 // pred_check
        %p128 = pneg %p127
      $region22: #{tpu_custom_call.1} parent=5 // pred_check_branch
        %130 = sbr.rel (%p128) target = $region24
      $region23: #{tpu_custom_call.1} parent=5 // pred_region
        // Predicated region
        $region25: #{tpu_custom_call.1} parent=23 // pred_check
          %p131 = pneg %p32
        $region26: #{tpu_custom_call.1} parent=23 // pred_check_branch
          %133 = sbr.rel (%p131) target = $region28
        $region27: #{tpu_custom_call.1} parent=23 // pred_region
          %s134 = smul.u32 32, %s12
          %p135 = scmp.lt.s32.totalorder %s134, 63
          %s136 = scalar_select %p135, %s134, 63
          %s137 = smul.addr %s136, 8
          %s138 = scalar_lea.vmem %s0, %s137
          %s139 = smul.u32 32, %s12
        $region28: #{tpu_custom_call.1} parent=23 // pred_fallthru
          _
      $region24: #{tpu_custom_call.1} parent=5 // pred_fallthru
        _
      %p140 = scmp.le.s32.totalorder 1, %s12
      %p141 = scmp.lt.s32.totalorder %s12, 3
      %p142 = pnand %p140, %p141
      %p143 = pneg %p142
      // Predicated region
      $region29: #{tpu_custom_call.1} parent=5 // pred_check
        _
      $region30: #{tpu_custom_call.1} parent=5 // pred_check_branch
        %145 = sbr.rel (%p142) target = $region32
      $region31: #{tpu_custom_call.1} parent=5 // pred_region
        %s146 = ssub.s32 %s12, 1
        %s147 = smul.u32 32, %s17
        %p148 = scmp.lt.s32.totalorder %s147, 63
        %s149 = scalar_select %p148, %s147, 63
        %s150 = smul.addr %s149, 8
        %s151 = scalar_lea.vmem %s0, %s150
        %p152 = pneg %p38
        %p153 = pneg %p35
        %p154 = pneg %p59
        %p155 = pneg %p56
        %p156 = pneg %p80
        %p157 = pneg %p77
        %p158 = pneg %p106
        %p159 = pneg %p103
        %s160 = sand.u32 %s93, 1
        %s161 = scalar_lea.sflag [#allocation3], %s160
        %s162 = sand.u32 %s93, 1
        %s163 = smul.addr %s162, 256
        %s164 = scalar_lea.vmem [#allocation2], %s163
        %s165 = smul.u32 32, %s17
        %p166 = scmp.lt.s32.totalorder %s165, 63
        %s167 = scalar_select %p166, %s165, 63
        %s168 = smul.addr %s167, 8
        %s169 = scalar_lea.vmem %s0, %s168
        %s170 = smul.u32 32, %s17
        %s171 = smul.u32 32, %s17
        %v172 = vld [vmem:[%s169] sm:$0xff]
        %v173 = vld [vmem:[%s169 + $0x8] sm:$0xff]
        %v174 = vld [vmem:[%s169 + $0x10] sm:$0xff]
        %v175 = vld [vmem:[%s169 + $0x18] sm:$0xff]
        %v176 = vld [vmem:[%s169 + $0x20] sm:$0xff]
        %v177 = vld [vmem:[%s169 + $0x28] sm:$0xff]
        %v178 = vld [vmem:[%s169 + $0x30] sm:$0xff]
        %v179 = vld [vmem:[%s169 + $0x38] sm:$0xff]
        %v180 = vld [vmem:[%s169 + $0x40] sm:$0xff]
        %v181 = vld [vmem:[%s169 + $0x48] sm:$0xff]
        %v182 = vld [vmem:[%s169 + $0x50] sm:$0xff]
        %v183 = vld [vmem:[%s169 + $0x58] sm:$0xff]
        %v184 = vld [vmem:[%s169 + $0x60] sm:$0xff]
        %v185 = vld [vmem:[%s169 + $0x68] sm:$0xff]
        %v186 = vld [vmem:[%s169 + $0x70] sm:$0xff]
        %v187 = vld [vmem:[%s169 + $0x78] sm:$0xff]
        %v188 = vld [vmem:[%s169 + $0x80] sm:$0xff]
        %v189 = vld [vmem:[%s169 + $0x88] sm:$0xff]
        %v190 = vld [vmem:[%s169 + $0x90] sm:$0xff]
        %v191 = vld [vmem:[%s169 + $0x98] sm:$0xff]
        %v192 = vld [vmem:[%s169 + $0xa0] sm:$0xff]
        %v193 = vld [vmem:[%s169 + $0xa8] sm:$0xff]
        %v194 = vld [vmem:[%s169 + $0xb0] sm:$0xff]
        %v195 = vld [vmem:[%s169 + $0xb8] sm:$0xff]
        %v196 = vld [vmem:[%s169 + $0xc0] sm:$0xff]
        %v197 = vld [vmem:[%s169 + $0xc8] sm:$0xff]
        %v198 = vld [vmem:[%s169 + $0xd0] sm:$0xff]
        %v199 = vld [vmem:[%s169 + $0xd8] sm:$0xff]
        %v200 = vld [vmem:[%s169 + $0xe0] sm:$0xff]
        %v201 = vld [vmem:[%s169 + $0xe8] sm:$0xff]
        %v202 = vld [vmem:[%s169 + $0xf0] sm:$0xff]
        %v203 = vld [vmem:[%s169 + $0xf8] sm:$0xff]
        %v204 = vld [vmem:[%s1] sm:$0xff]
        %v205 = vld [vmem:[%s1 + $0x8] sm:$0xff]
        %v206 = vld [vmem:[%s1 + $0x10] sm:$0xff]
        %v207 = vld [vmem:[%s1 + $0x18] sm:$0xff]
        %v208 = vld [vmem:[%s1 + $0x20] sm:$0xf]
        %v209 = vld [vmem:[%s2] sm:$0x1]
        %v211 = vlaneseq
        %v212 = vshrl.u32 %v211, 7
        %v213 = vsub.s32 0, %v212
        %v214 = vrot.slane %v209, %v213
        %vm216 = vcmask 293888
        %v218 = vsel %vm216, %v172, 0
        %v221 = vsel %vm216, %v173, 0
        %v224 = vsel %vm216, %v174, 0
        %v227 = vsel %vm216, %v175, 0
        %v230 = vsel %vm216, %v176, 0
        %v233 = vsel %vm216, %v177, 0
        %v236 = vsel %vm216, %v178, 0
        %v239 = vsel %vm216, %v179, 0
        %v242 = vsel %vm216, %v180, 0
        %v245 = vsel %vm216, %v181, 0
        %v248 = vsel %vm216, %v182, 0
        %v251 = vsel %vm216, %v183, 0
        %v254 = vsel %vm216, %v184, 0
        %v257 = vsel %vm216, %v185, 0
        %v260 = vsel %vm216, %v186, 0
        %v263 = vsel %vm216, %v187, 0
        %v266 = vsel %vm216, %v188, 0
        %v269 = vsel %vm216, %v189, 0
        %v272 = vsel %vm216, %v190, 0
        %v275 = vsel %vm216, %v191, 0
        %v278 = vsel %vm216, %v192, 0
        %v281 = vsel %vm216, %v193, 0
        %v284 = vsel %vm216, %v194, 0
        %v287 = vsel %vm216, %v195, 0
        %v290 = vsel %vm216, %v196, 0
        %v293 = vsel %vm216, %v197, 0
        %v296 = vsel %vm216, %v198, 0
        %v299 = vsel %vm216, %v199, 0
        %v302 = vsel %vm216, %v200, 0
        %v305 = vsel %vm216, %v201, 0
        %v308 = vsel %vm216, %v202, 0
        %v311 = vsel %vm216, %v203, 0
        %vm313 = vcmask 1043456
        %v315 = vsel %vm313, %v208, 0
        %317 = vmatprep.subr.mxu0 0.0
        %318 = vmatpush1.msra.mxu0 %v204
        %319 = vmatprep.subr.mxu0 0.0
        %320 = vmatpush1.msra.mxu0 %v205
        %321 = vmatprep.subr.mxu0 0.0
        %322 = vmatpush1.msra.mxu0 %v206
        %323 = vmatprep.subr.mxu0 0.0
        %324 = vmatpush1.msra.mxu0 %v207
        %325 = vmatprep.subr.mxu0 0.0
        %326 = vmatpush1.msra.mxu0 %v315
        %327 = vmatprep.subr.mxu0 0.0
        %328 = vmatpush1.msra.mxu0 0.0
        %329 = vmatprep.subr.mxu0 0.0
        %330 = vmatpush1.msra.mxu0 0.0
        %331 = vmatprep.subr.mxu0 0.0
        %332 = vmatpush1.msra.mxu0 0.0
        %333 = vmatprep.subr.mxu0 0.0
        %334 = vmatpush1.msra.mxu0 0.0
        %335 = vmatprep.subr.mxu0 0.0
        %336 = vmatpush1.msra.mxu0 0.0
        %337 = vmatprep.subr.mxu0 0.0
        %338 = vmatpush1.msra.mxu0 0.0
        %339 = vmatprep.subr.mxu0 0.0
        %340 = vmatpush1.msra.mxu0 0.0
        %341 = vmatprep.subr.mxu0 0.0
        %342 = vmatpush1.msra.mxu0 0.0
        %343 = vmatprep.subr.mxu0 0.0
        %344 = vmatpush1.msra.mxu0 0.0
        %345 = vmatprep.subr.mxu0 0.0
        %346 = vmatpush1.msra.mxu0 0.0
        %347 = vmatprep.subr.mxu0 0.0
        %348 = vmatpush1.msra.mxu0 0.0
        %349 = vmatprep.subr.mxu0 0.0
        %350 = vmatpush1.msra.mxu0 0.0
        %351 = vmatprep.subr.mxu0 0.0
        %352 = vmatpush1.msra.mxu0 0.0
        %353 = vmatprep.subr.mxu0 0.0
        %354 = vmatpush1.msra.mxu0 0.0
        %355 = vmatprep.subr.mxu0 0.0
        %356 = vmatpush1.msra.mxu0 0.0
        %357 = vmatprep.subr.mxu0 0.0
        %358 = vmatpush1.msra.mxu0 0.0
        %359 = vmatprep.subr.mxu0 0.0
        %360 = vmatpush1.msra.mxu0 0.0
        %361 = vmatprep.subr.mxu0 0.0
        %362 = vmatpush1.msra.mxu0 0.0
        %363 = vmatprep.subr.mxu0 0.0
        %364 = vmatpush1.msra.mxu0 0.0
        %365 = vmatprep.subr.mxu0 0.0
        %366 = vmatpush1.msra.mxu0 0.0
        %367 = vmatprep.subr.mxu0 0.0
        %368 = vmatpush1.msra.mxu0 0.0
        %369 = vmatprep.subr.mxu0 0.0
        %370 = vmatpush1.msra.mxu0 0.0
        %371 = vmatprep.subr.mxu0 0.0
        %372 = vmatpush1.msra.mxu0 0.0
        %373 = vmatprep.subr.mxu0 0.0
        %374 = vmatpush1.msra.mxu0 0.0
        %375 = vmatprep.subr.mxu0 0.0
        %376 = vmatpush1.msra.mxu0 0.0
        %377 = vmatprep.subr.mxu0 0.0
        %378 = vmatpush1.msra.mxu0 0.0
        %379 = vmatprep.subr.mxu0 0.0
        %380 = vmatpush1.msra.mxu0 0.0
        %381 = vmatprep.mubr.f32.mxu0 0.0
        %382 = vmatmul.mubr.f32.gmra.mrb[0].mxu0 %v218
        %v383 = vpop.f32.mrb[0].mxu0
        %v384 = vadd.f32 %v214, %v383
        %v385 = vpop.f32.mrb[0].mxu0
        %386 = vmatprep.mubr.f32.mxu0 0.0
        %387 = vmatmul.mubr.f32.gmra.mrb[0].mxu0 %v221
        %v388 = vpop.f32.mrb[0].mxu0
        %v389 = vadd.f32 %v214, %v388
        %v390 = vpop.f32.mrb[0].mxu0
        %391 = vmatprep.mubr.f32.mxu0 0.0
        %392 = vmatmul.mubr.f32.gmra.mrb[0].mxu0 %v224
        %v393 = vpop.f32.mrb[0].mxu0
        %v394 = vadd.f32 %v214, %v393
        %v395 = vpop.f32.mrb[0].mxu0
        %396 = vmatprep.mubr.f32.mxu0 0.0
        %397 = vmatmul.mubr.f32.gmra.mrb[0].mxu0 %v227
        %v398 = vpop.f32.mrb[0].mxu0
        %v399 = vadd.f32 %v214, %v398
        %v400 = vpop.f32.mrb[0].mxu0
        %401 = vmatprep.mubr.f32.mxu0 0.0
        %402 = vmatmul.mubr.f32.gmra.mrb[0].mxu0 %v230
        %v403 = vpop.f32.mrb[0].mxu0
        %v404 = vadd.f32 %v214, %v403
        %v405 = vpop.f32.mrb[0].mxu0
        %406 = vmatprep.mubr.f32.mxu0 0.0
        %407 = vmatmul.mubr.f32.gmra.mrb[0].mxu0 %v233
        %v408 = vpop.f32.mrb[0].mxu0
        %v409 = vadd.f32 %v214, %v408
        %v410 = vpop.f32.mrb[0].mxu0
        %411 = vmatprep.mubr.f32.mxu0 0.0
        %412 = vmatmul.mubr.f32.gmra.mrb[0].mxu0 %v236
        %v413 = vpop.f32.mrb[0].mxu0
        %v414 = vadd.f32 %v214, %v413
        %v415 = vpop.f32.mrb[0].mxu0
        %416 = vmatprep.mubr.f32.mxu0 0.0
        %417 = vmatmul.mubr.f32.gmra.mrb[0].mxu0 %v239
        %v418 = vpop.f32.mrb[0].mxu0
        %v419 = vadd.f32 %v214, %v418
        %v420 = vpop.f32.mrb[0].mxu0
        %421 = vmatprep.mubr.f32.mxu0 0.0
        %422 = vmatmul.mubr.f32.gmra.mrb[0].mxu0 %v242
        %v423 = vpop.f32.mrb[0].mxu0
        %v424 = vadd.f32 %v214, %v423
        %v425 = vpop.f32.mrb[0].mxu0
        %426 = vmatprep.mubr.f32.mxu0 0.0
        %427 = vmatmul.mubr.f32.gmra.mrb[0].mxu0 %v245
        %v428 = vpop.f32.mrb[0].mxu0
        %v429 = vadd.f32 %v214, %v428
        %v430 = vpop.f32.mrb[0].mxu0
        %431 = vmatprep.mubr.f32.mxu0 0.0
        %432 = vmatmul.mubr.f32.gmra.mrb[0].mxu0 %v248
        %v433 = vpop.f32.mrb[0].mxu0
        %v434 = vadd.f32 %v214, %v433
        %v435 = vpop.f32.mrb[0].mxu0
        %436 = vmatprep.mubr.f32.mxu0 0.0
        %437 = vmatmul.mubr.f32.gmra.mrb[0].mxu0 %v251
        %v438 = vpop.f32.mrb[0].mxu0
        %v439 = vadd.f32 %v214, %v438
        %v440 = vpop.f32.mrb[0].mxu0
        %441 = vmatprep.mubr.f32.mxu0 0.0
        %442 = vmatmul.mubr.f32.gmra.mrb[0].mxu0 %v254
        %v443 = vpop.f32.mrb[0].mxu0
        %v444 = vadd.f32 %v214, %v443
        %v445 = vpop.f32.mrb[0].mxu0
        %446 = vmatprep.mubr.f32.mxu0 0.0
        %447 = vmatmul.mubr.f32.gmra.mrb[0].mxu0 %v257
        %v448 = vpop.f32.mrb[0].mxu0
        %v449 = vadd.f32 %v214, %v448
        %v450 = vpop.f32.mrb[0].mxu0
        %451 = vmatprep.mubr.f32.mxu0 0.0
        %452 = vmatmul.mubr.f32.gmra.mrb[0].mxu0 %v260
        %v453 = vpop.f32.mrb[0].mxu0
        %v454 = vadd.f32 %v214, %v453
        %v455 = vpop.f32.mrb[0].mxu0
        %456 = vmatprep.mubr.f32.mxu0 0.0
        %457 = vmatmul.mubr.f32.gmra.mrb[0].mxu0 %v263
        %v458 = vpop.f32.mrb[0].mxu0
        %v459 = vadd.f32 %v214, %v458
        %v460 = vpop.f32.mrb[0].mxu0
        %461 = vmatprep.mubr.f32.mxu0 0.0
        %462 = vmatmul.mubr.f32.gmra.mrb[0].mxu0 %v266
        %v463 = vpop.f32.mrb[0].mxu0
        %v464 = vadd.f32 %v214, %v463
        %v465 = vpop.f32.mrb[0].mxu0
        %466 = vmatprep.mubr.f32.mxu0 0.0
        %467 = vmatmul.mubr.f32.gmra.mrb[0].mxu0 %v269
        %v468 = vpop.f32.mrb[0].mxu0
        %v469 = vadd.f32 %v214, %v468
        %v470 = vpop.f32.mrb[0].mxu0
        %471 = vmatprep.mubr.f32.mxu0 0.0
        %472 = vmatmul.mubr.f32.gmra.mrb[0].mxu0 %v272
        %v473 = vpop.f32.mrb[0].mxu0
        %v474 = vadd.f32 %v214, %v473
        %v475 = vpop.f32.mrb[0].mxu0
        %476 = vmatprep.mubr.f32.mxu0 0.0
        %477 = vmatmul.mubr.f32.gmra.mrb[0].mxu0 %v275
        %v478 = vpop.f32.mrb[0].mxu0
        %v479 = vadd.f32 %v214, %v478
        %v480 = vpop.f32.mrb[0].mxu0
        %481 = vmatprep.mubr.f32.mxu0 0.0
        %482 = vmatmul.mubr.f32.gmra.mrb[0].mxu0 %v278
        %v483 = vpop.f32.mrb[0].mxu0
        %v484 = vadd.f32 %v214, %v483
        %v485 = vpop.f32.mrb[0].mxu0
        %486 = vmatprep.mubr.f32.mxu0 0.0
        %487 = vmatmul.mubr.f32.gmra.mrb[0].mxu0 %v281
        %v488 = vpop.f32.mrb[0].mxu0
        %v489 = vadd.f32 %v214, %v488
        %v490 = vpop.f32.mrb[0].mxu0
        %491 = vmatprep.mubr.f32.mxu0 0.0
        %492 = vmatmul.mubr.f32.gmra.mrb[0].mxu0 %v284
        %v493 = vpop.f32.mrb[0].mxu0
        %v494 = vadd.f32 %v214, %v493
        %v495 = vpop.f32.mrb[0].mxu0
        %496 = vmatprep.mubr.f32.mxu0 0.0
        %497 = vmatmul.mubr.f32.gmra.mrb[0].mxu0 %v287
        %v498 = vpop.f32.mrb[0].mxu0
        %v499 = vadd.f32 %v214, %v498
        %v500 = vpop.f32.mrb[0].mxu0
        %501 = vmatprep.mubr.f32.mxu0 0.0
        %502 = vmatmul.mubr.f32.gmra.mrb[0].mxu0 %v290
        %v503 = vpop.f32.mrb[0].mxu0
        %v504 = vadd.f32 %v214, %v503
        %v505 = vpop.f32.mrb[0].mxu0
        %506 = vmatprep.mubr.f32.mxu0 0.0
        %507 = vmatmul.mubr.f32.gmra.mrb[0].mxu0 %v293
        %v508 = vpop.f32.mrb[0].mxu0
        %v509 = vadd.f32 %v214, %v508
        %v510 = vpop.f32.mrb[0].mxu0
        %511 = vmatprep.mubr.f32.mxu0 0.0
        %512 = vmatmul.mubr.f32.gmra.mrb[0].mxu0 %v296
        %v513 = vpop.f32.mrb[0].mxu0
        %v514 = vadd.f32 %v214, %v513
        %v515 = vpop.f32.mrb[0].mxu0
        %516 = vmatprep.mubr.f32.mxu0 0.0
        %517 = vmatmul.mubr.f32.gmra.mrb[0].mxu0 %v299
        %v518 = vpop.f32.mrb[0].mxu0
        %v519 = vadd.f32 %v214, %v518
        %v520 = vpop.f32.mrb[0].mxu0
        %521 = vmatprep.mubr.f32.mxu0 0.0
        %522 = vmatmul.mubr.f32.gmra.mrb[0].mxu0 %v302
        %v523 = vpop.f32.mrb[0].mxu0
        %v524 = vadd.f32 %v214, %v523
        %v525 = vpop.f32.mrb[0].mxu0
        %526 = vmatprep.mubr.f32.mxu0 0.0
        %527 = vmatmul.mubr.f32.gmra.mrb[0].mxu0 %v305
        %v528 = vpop.f32.mrb[0].mxu0
        %v529 = vadd.f32 %v214, %v528
        %v530 = vpop.f32.mrb[0].mxu0
        %531 = vmatprep.mubr.f32.mxu0 0.0
        %532 = vmatmul.mubr.f32.gmra.mrb[0].mxu0 %v308
        %v533 = vpop.f32.mrb[0].mxu0
        %v534 = vadd.f32 %v214, %v533
        %v535 = vpop.f32.mrb[0].mxu0
        %536 = vmatprep.mubr.f32.mxu0 0.0
        %537 = vmatmul.mubr.f32.gmra.mrb[0].mxu0 %v311
        %v538 = vpop.f32.mrb[0].mxu0
        %v539 = vadd.f32 %v214, %v538
        %v540 = vpop.f32.mrb[0].mxu0
        %541 = vdwg.mxu0
        %542 = vst [vmem:[%s164] sm:$0xff] %v384
        %543 = vst [vmem:[%s164 + $0x8] sm:$0xff] %v389
        %544 = vst [vmem:[%s164 + $0x10] sm:$0xff] %v394
        %545 = vst [vmem:[%s164 + $0x18] sm:$0xff] %v399
        %546 = vst [vmem:[%s164 + $0x20] sm:$0xff] %v404
        %547 = vst [vmem:[%s164 + $0x28] sm:$0xff] %v409
        %548 = vst [vmem:[%s164 + $0x30] sm:$0xff] %v414
        %549 = vst [vmem:[%s164 + $0x38] sm:$0xff] %v419
        %550 = vst [vmem:[%s164 + $0x40] sm:$0xff] %v424
        %551 = vst [vmem:[%s164 + $0x48] sm:$0xff] %v429
        %552 = vst [vmem:[%s164 + $0x50] sm:$0xff] %v434
        %553 = vst [vmem:[%s164 + $0x58] sm:$0xff] %v439
        %554 = vst [vmem:[%s164 + $0x60] sm:$0xff] %v444
        %555 = vst [vmem:[%s164 + $0x68] sm:$0xff] %v449
        %556 = vst [vmem:[%s164 + $0x70] sm:$0xff] %v454
        %557 = vst [vmem:[%s164 + $0x78] sm:$0xff] %v459
        %558 = vst [vmem:[%s164 + $0x80] sm:$0xff] %v464
        %559 = vst [vmem:[%s164 + $0x88] sm:$0xff] %v469
        %560 = vst [vmem:[%s164 + $0x90] sm:$0xff] %v474
        %561 = vst [vmem:[%s164 + $0x98] sm:$0xff] %v479
        %562 = vst [vmem:[%s164 + $0xa0] sm:$0xff] %v484
        %563 = vst [vmem:[%s164 + $0xa8] sm:$0xff] %v489
        %564 = vst [vmem:[%s164 + $0xb0] sm:$0xff] %v494
        %565 = vst [vmem:[%s164 + $0xb8] sm:$0xff] %v499
        %566 = vst [vmem:[%s164 + $0xc0] sm:$0xff] %v504
        %567 = vst [vmem:[%s164 + $0xc8] sm:$0xff] %v509
        %568 = vst [vmem:[%s164 + $0xd0] sm:$0xff] %v514
        %569 = vst [vmem:[%s164 + $0xd8] sm:$0xff] %v519
        %570 = vst [vmem:[%s164 + $0xe0] sm:$0xff] %v524
        %571 = vst [vmem:[%s164 + $0xe8] sm:$0xff] %v529
        %572 = vst [vmem:[%s164 + $0xf0] sm:$0xff] %v534
        %573 = vst [vmem:[%s164 + $0xf8] sm:$0xff] %v539
        %s574 = sand.u32 %s93, 1
        %s575 = scalar_lea.sflag [#allocation3], %s574
        %s576 = sand.u32 %s93, 1
        %s577 = smul.addr %s576, 256
        %s578 = scalar_lea.vmem [#allocation2], %s577
        // Predicated region
        $region33: #{tpu_custom_call.1} parent=31 // pred_check
          %p579 = pneg %p103
        $region34: #{tpu_custom_call.1} parent=31 // pred_check_branch
          %581 = sbr.rel (%p579) target = $region36
        $region35: #{tpu_custom_call.1} parent=31 // pred_region
          %s582 = smul.u32 32, %s17
          %s584 = ssub.s32 4096, 4096
          %585 = vsyncadd %s575, %s584
          %s586 = smul.addr %s582, 128
          %s587 = scalar_lea.hbm %s3, %s586
          %s588 = sshll.u32 %s578, 4
          %s589 = int_to_ptr.vmem [resolvable:$true] %s588
          %594 = dma.vmem_to_hbm [thread:$0]  %s589, 4096, %s587, %s575, 128, 128, 8
        $region36: #{tpu_custom_call.1} parent=31 // pred_fallthru
          _
      $region32: #{tpu_custom_call.1} parent=5 // pred_fallthru
        _
      %p595 = scmp.le.s32.totalorder 2, %s12
      // Predicated region
      $region37: #{tpu_custom_call.1} parent=5 // pred_check
        %p596 = pneg %p595
      $region38: #{tpu_custom_call.1} parent=5 // pred_check_branch
        %598 = sbr.rel (%p596) target = $region40
      $region39: #{tpu_custom_call.1} parent=5 // pred_region
        %s599 = ssub.s32 %s12, 2
        // Predicated region
        $region41: #{tpu_custom_call.1} parent=39 // pred_check
          %p600 = pneg %p109
        $region42: #{tpu_custom_call.1} parent=39 // pred_check_branch
          %602 = sbr.rel (%p600) target = $region44
        $region43: #{tpu_custom_call.1} parent=39 // pred_region
          %s603 = sand.u32 %s94, 1
          %s604 = scalar_lea.sflag [#allocation3], %s603
          %s605 = sand.u32 %s94, 1
          %s606 = smul.addr %s605, 256
          %s607 = scalar_lea.vmem [#allocation2], %s606
          %608 = dma.done %s604, 4096
        $region44: #{tpu_custom_call.1} parent=39 // pred_fallthru
          _
      $region40: #{tpu_custom_call.1} parent=5 // pred_fallthru
        _
    $region6: #{tpu_custom_call.1} parent=1 // loop_footer
      %s16 = sadd.s32 1, %s12
    $region7: #{tpu_custom_call.1} parent=1 // loop_footer_branch
      %11 = sbr.rel target = $region3
    $region8: #{tpu_custom_call.1} parent=1 // loop_exit
      _
    %609 = vsyncpa [#allocation3], 1
    %s610 = scalar_lea.sflag [#allocation3], 1
    %611 = vsyncpa %s610, 1

</llo_original>
